<compile_context>
chip_gen: v7x
topology: tpu7x:2x2x1
jax: 0.10.0
libtpu: 0.0.40
codegen_flags: <defaults>
</compile_context>

<pallas_src>
import functools

import jax
import jax.numpy as jnp
from jax.experimental import pallas as pl
from jax.experimental.pallas import tpu as pltpu


_LANE_COLS = 512        # lane-dense width: multiple of 128 -> unmasked stores
_MAX_TILE_ROWS = 512    # 512x512 f32 tile = 1 MiB per buffer (2 in + 2 out ~ 4 MiB VMEM)


def _activation_kernel(x_ref, o_ref, *, activation: str):
    x = x_ref[...]
    if activation == "tanh":
        o_ref[...] = jnp.tanh(x)
    elif activation == "sigmoid":
        # sigmoid(x) == 0.5 * (tanh(0.5 * x) + 1): single EUP transcendental;
        # the mul/add ride otherwise-idle VPU slots.
        half = jnp.asarray(0.5, dtype=x.dtype)
        one = jnp.asarray(1.0, dtype=x.dtype)
        o_ref[...] = half * (jnp.tanh(half * x) + one)
    elif activation == "relu":
        o_ref[...] = jnp.maximum(x, jnp.zeros_like(x))
    else:  # never reached; 'none' handled in the wrapper
        o_ref[...] = x


def activation_forward(x: jax.Array, activation: str) -> jax.Array:
    """Forward pass of the Activation module. Accepts any shape (e.g. NCHW)."""
    if activation == "none":
        # PyTorch returns the input unchanged.
        return x
    if activation not in ("tanh", "sigmoid", "relu"):
        raise NameError("=== ERROR: activation " + str(activation) + " not supported")

    orig_shape = x.shape
    total = x.size
    if total == 0:
        return x

    # ---- lane-dense flatten + pad ------------------------------------------
    cols = _LANE_COLS
    rows = -(-total // cols)  # ceil-div
    if rows <= _MAX_TILE_ROWS:
        # single tile: round rows up to a multiple of 8 (sublane granularity)
        tile_rows = max(8, ((rows + 7) // 8) * 8)
    else:
        tile_rows = _MAX_TILE_ROWS
    rows_padded = ((rows + tile_rows - 1) // tile_rows) * tile_rows
    padded_total = rows_padded * cols

    x_flat = x.reshape(-1)
    if padded_total != total:
        x_flat = jnp.pad(x_flat, (0, padded_total - total))
    x2d = x_flat.reshape(rows_padded, cols)

    # ---- tiled, pipelined elementwise kernel --------------------------------
    grid = (rows_padded // tile_rows,)
    kernel = functools.partial(_activation_kernel, activation=activation)

    itemsize = jnp.dtype(x.dtype).itemsize
    cost = pl.CostEstimate(
        flops=padded_total,
        transcendentals=padded_total if activation in ("tanh", "sigmoid") else 0,
        bytes_accessed=2 * padded_total * itemsize,
    )

    out2d = pl.pallas_call(
        kernel,
        out_shape=jax.ShapeDtypeStruct((rows_padded, cols), x.dtype),
        grid_spec=pl.GridSpec(
            grid=grid,
            in_specs=[pl.BlockSpec((tile_rows, cols), lambda i: (i, 0))],
            out_specs=pl.BlockSpec((tile_rows, cols), lambda i: (i, 0)),
        ),
        compiler_params=pltpu.CompilerParams(
            dimension_semantics=("parallel",),  # independent tiles -> megacore split
        ),
        cost_estimate=cost,
    )(x2d)

    # ---- undo padding / layout plumbing -------------------------------------
    out_flat = out2d.reshape(-1)
    if padded_total != total:
        out_flat = out_flat[:total]
    return out_flat.reshape(orig_shape)


if __name__ == "__main__":
    key = jax.random.PRNGKey(0)
    # Small NCHW input consistent with typical SNN conv activations.
    x = jax.random.normal(key, (2, 4, 16, 16), dtype=jnp.float32)

    ok = True
    for act_name, ref_fn in [
        ("tanh", jnp.tanh),
        ("sigmoid", jax.nn.sigmoid),
        ("relu", lambda v: jnp.maximum(v, 0.0)),
        ("none", lambda v: v),
    ]:
        y = activation_forward(x, act_name)
        y = jax.block_until_ready(y)
        y_ref = ref_fn(x)
        if y.shape != x.shape or y.dtype != x.dtype:
            ok = False
        if not jnp.allclose(y, y_ref, atol=1e-5, rtol=1e-5):
            ok = False

    if ok:
        print("KERNEL_OK")
</pallas_src>

<mosaic_0001>
module attributes {stable_mosaic.version = 11 : i64} {
  func.func @_activation_kernel(%arg0: i32, %arg1: memref<8x512xf32, #tpu.memory_space<vmem>>, %arg2: memref<8x512xf32, #tpu.memory_space<vmem>>) attributes {dimension_semantics = [#tpu.dimension_semantics<parallel>], iteration_bounds = array<i64: 1>, scalar_prefetch = 0 : i64, scratch_operands = 0 : i64, tpu.core_type = #tpu.core_type<tc>, window_params = [{transform_indices = @transform_0, window_bounds = array<i64: 8, 512>}, {transform_indices = @transform_1, window_bounds = array<i64: 8, 512>}]} {
    %c0 = arith.constant 0 : index
    %c0_0 = arith.constant 0 : index
    %0 = vector.load %arg1[%c0, %c0_0] : memref<8x512xf32, #tpu.memory_space<vmem>>, vector<8x512xf32>
    %1 = math.tanh %0 : vector<8x512xf32>
    %c0_1 = arith.constant 0 : index
    %c0_2 = arith.constant 0 : index
    %2 = vector.load %arg2[%c0_1, %c0_2] : memref<8x512xf32, #tpu.memory_space<vmem>>, vector<8x512xf32>
    tpu.vector_store %arg2[%c0_1, %c0_2], %1 {strides = array<i32>} : memref<8x512xf32, #tpu.memory_space<vmem>>, vector<8x512xf32>,
    return
  }
  func.func @transform_0(%arg0: i32) -> (i32, i32) {
    %c0_i32 = arith.constant 0 : i32
    %c0_i32_0 = arith.constant 0 : i32
    return %arg0, %c0_i32 : i32, i32
  }
  func.func @transform_1(%arg0: i32) -> (i32, i32) {
    %c0_i32 = arith.constant 0 : i32
    %c0_i32_0 = arith.constant 0 : i32
    return %arg0, %c0_i32 : i32, i32
  }
}

</mosaic_0001>

<llo_original>
// kernel: tpu_custom_call.1
$region0: #{tpu_custom_call.1}
  #allocation0 [shape = 'u32[]', space=smem, size = 0x4, offset = 0x4, fixed_abs, tag = 'smem constant byte address 0x4 - core index']
  #allocation1 [shape = 'u32[144,128]{1,0:T(1,128)}', space=vmem, size = 0x12000, scoped, tag = 'internal scratch']
  %s0 = inlined_call_operand.hbm [shape: f32[8,512], index: 0, kind: input, shape index: {}]
  %s1 = inlined_call_operand.hbm [shape: f32[8,512], index: 1, kind: output, shape index: {}]
  %s2 = sld [smem:[#allocation0]]
  $region18: #{tpu_custom_call.1} parent=0
    _
  %s4 = ssub.s32 1, %s2
  %s5 = scalar_select 0, %s4, %s2
  $region1: #{tpu_custom_call.1} parent=0
    #allocation2 [shape = 'u8[16384]{0}', space=vmem, size = 0x4000, scoped, tag = 'input window, operand 0, single buffered']
    #allocation3 [shape = 's32[1]{0}', space=sflag, size = 0x4, scoped, tag = 'scoped memory for tpu_custom_call.1']
    #allocation4 [shape = 's32[1]{0}', space=sflag, size = 0x4, scoped, tag = 'scoped memory for tpu_custom_call.1']
    #allocation5 [shape = 'u8[16384]{0}', space=vmem, size = 0x4000, scoped, tag = 'output window, operand 0, single buffered']
    %6 = vsyncpa [#allocation3], 0
    %7 = vsyncpa [#allocation4], 0
    // Predicated region
    $region2: #{tpu_custom_call.1} parent=1 // pred_check
      _
    $region3: #{tpu_custom_call.1} parent=1 // pred_check_branch
      %9 = sbr.rel (0) target = $region5
    $region4: #{tpu_custom_call.1} parent=1 // pred_region
      %s11 = ssub.s32 512, 512
      %12 = vsyncadd [#allocation3], %s11
      %s14 = sshll.u32 [#allocation2], 4
      %s15 = int_to_ptr.vmem [resolvable:$true] %s14
      %17 = dma.hbm_to_vmem [thread:$0]  %s0, 512, %s15, [#allocation3]
    $region5: #{tpu_custom_call.1} parent=1 // pred_fallthru
      _
    // Predicated region
    $region6: #{tpu_custom_call.1} parent=1 // pred_check
      _
    $region7: #{tpu_custom_call.1} parent=1 // pred_check_branch
      %19 = sbr.rel (0) target = $region9
    $region8: #{tpu_custom_call.1} parent=1 // pred_region
      %20 = dma.done [#allocation3], 512
    $region9: #{tpu_custom_call.1} parent=1 // pred_fallthru
      _
    %v21 = vld [vmem:[#allocation2] sm:$0xff]
    %v22 = vld [vmem:[#allocation2 + $0x8] sm:$0xff]
    %v23 = vld [vmem:[#allocation2 + $0x10] sm:$0xff]
    %v24 = vld [vmem:[#allocation2 + $0x18] sm:$0xff]
    %v25 = vtanh.pop %v21
    %v26 = vtanh.pop %v22
    %v27 = vtanh.pop %v23
    %v28 = vtanh.pop %v24
    %29 = vst [vmem:[#allocation5] sm:$0xff] %v25
    %30 = vst [vmem:[#allocation5 + $0x8] sm:$0xff] %v26
    %31 = vst [vmem:[#allocation5 + $0x10] sm:$0xff] %v27
    %32 = vst [vmem:[#allocation5 + $0x18] sm:$0xff] %v28
    // Predicated region
    $region10: #{tpu_custom_call.1} parent=1 // pred_check
      _
    $region11: #{tpu_custom_call.1} parent=1 // pred_check_branch
      %34 = sbr.rel (0) target = $region13
    $region12: #{tpu_custom_call.1} parent=1 // pred_region
      %s36 = ssub.s32 512, 512
      %37 = vsyncadd [#allocation4], %s36
      %s39 = sshll.u32 [#allocation5], 4
      %s40 = int_to_ptr.vmem [resolvable:$true] %s39
      %42 = dma.vmem_to_hbm [thread:$0]  %s40, 512, %s1, [#allocation4]
    $region13: #{tpu_custom_call.1} parent=1 // pred_fallthru
      _
    // Predicated region
    $region14: #{tpu_custom_call.1} parent=1 // pred_check
      _
    $region15: #{tpu_custom_call.1} parent=1 // pred_check_branch
      %44 = sbr.rel (0) target = $region17
    $region16: #{tpu_custom_call.1} parent=1 // pred_region
      %45 = dma.done [#allocation4], 512
    $region17: #{tpu_custom_call.1} parent=1 // pred_fallthru
      _
    %46 = vsyncpa [#allocation3], 1
    %47 = vsyncpa [#allocation4], 1

</llo_original>
